<compile_context>
chip_gen: v7x
topology: tpu7x:2x2x1
jax: 0.10.0
libtpu: 0.0.40
codegen_flags: <defaults>
</compile_context>

<pallas_src>
import jax
import jax.numpy as jnp
from jax.experimental import pallas as pl
from jax.experimental.pallas import tpu as pltpu


LANES = 128
MAX_TILE_ROWS = 4096          # 4096 * 128 * 4 B = 2 MiB per f32 input tile


def _round_up(x, m):
    return -(-x // m) * m


def _is_megacore():
    """True on chips whose grid is sharded across 2 TensorCores (v7x)."""
    try:
        return "7" in jax.devices()[0].device_kind
    except Exception:   # unknown platform: conservative single-core behavior
        return False


def _pick_tiling(rows, sublane_mult, megacore, max_tile_rows=MAX_TILE_ROWS):
    """Choose (tile_rows, grid_steps) for a (rows, 128) lane-dense slab."""
    if rows <= max_tile_rows:
        if megacore and rows >= 16 * sublane_mult:
            # Two steps so each TensorCore streams half of the slab.
            tile = _round_up(pl.cdiv(rows, 2), sublane_mult)
        else:
            # Single full-extent block: always layout-legal, zero extra
            # pipeline steps on single-TC chips.
            tile = rows
    else:
        tile = max_tile_rows
        steps = pl.cdiv(rows, tile)
        if megacore and steps % 2 == 1:
            # Rebalance to an even step count so the megacore split is even.
            tile = _round_up(pl.cdiv(rows, steps + 1), sublane_mult)
    return tile, pl.cdiv(rows, tile)


def _js_kernel(pre_ref, real_ref, out_ref):
    # Upcast so narrow dtypes (bf16) still get f32 logs; no-op for f32.
    pre = pre_ref[...].astype(jnp.float32)
    real = real_ref[...].astype(jnp.float32)
    m = 0.5 * (pre + real)
    inv_m = 1.0 / m            # one exact divide shared by both log terms
    jsd = 0.5 * (real * jnp.log(real * inv_m) + pre * jnp.log(pre * inv_m))
    out_ref[...] = jsd.astype(out_ref.dtype)


def _js_pointwise(pre, real):
    """Plain-jnp fallback for tiny inputs / the ragged (<128 elem) tail."""
    pre32 = pre.astype(jnp.float32)
    real32 = real.astype(jnp.float32)
    m = 0.5 * (pre32 + real32)
    jsd = 0.5 * (real32 * jnp.log(real32 / m) + pre32 * jnp.log(pre32 / m))
    return jsd.astype(pre.dtype)


def js_divergence(pre_v, real_v, *, max_tile_rows=MAX_TILE_ROWS):
    assert pre_v.shape == real_v.shape
    assert pre_v.dtype == real_v.dtype
    orig_shape = pre_v.shape
    dtype = pre_v.dtype
    itemsize = jnp.dtype(dtype).itemsize
    sublane_mult = 8 * max(1, 4 // itemsize)   # 8 (f32), 16 (bf16), 32 (i8)
    n = pre_v.size

    n_main = (n // LANES) * LANES
    if n_main == 0:
        # Smaller than one lane row: not worth a kernel launch.
        return _js_pointwise(pre_v, real_v).reshape(orig_shape)

    rows = n_main // LANES
    tile_rows, steps = _pick_tiling(rows, sublane_mult, _is_megacore(),
                                    max_tile_rows)

    pre_flat = pre_v.reshape(-1)
    real_flat = real_v.reshape(-1)
    if n_main == n:
        # Fast path: layout-free reshape to a lane-dense slab, no copies.
        pre2d = pre_flat.reshape(rows, LANES)
        real2d = real_flat.reshape(rows, LANES)
    else:
        # Ragged tail (< 128 elements): kernel handles the aligned prefix,
        # the tail is a tiny plain-jnp epilogue.  No whole-array jnp.pad.
        # TODO(synk): fold the tail into the kernel with a masked store to
        # also avoid the final concatenate pass over the output.
        pre2d = pre_flat[:n_main].reshape(rows, LANES)
        real2d = real_flat[:n_main].reshape(rows, LANES)

    spec = pl.BlockSpec((tile_rows, LANES), lambda i: (i, 0))
    cost = pl.CostEstimate(
        flops=8 * n_main,                       # adds / muls per element
        transcendentals=3 * n_main,             # 2 logs + 1 divide
        bytes_accessed=3 * n_main * itemsize,   # 2 inputs + 1 output
    )

    out2d = pl.pallas_call(
        _js_kernel,
        out_shape=jax.ShapeDtypeStruct((rows, LANES), dtype),
        grid_spec=pl.GridSpec(
            grid=(steps,),
            in_specs=[spec, spec],
            out_specs=spec,
        ),
        compiler_params=pltpu.CompilerParams(
            dimension_semantics=("parallel",),    # megacore split on v7x
            vmem_limit_bytes=32 * 1024 * 1024,    # raise v5e's 16 MiB default
        ),
        cost_estimate=cost,
    )(pre2d, real2d)

    if n_main == n:
        return out2d.reshape(orig_shape)
    tail = _js_pointwise(pre_flat[n_main:], real_flat[n_main:])
    return jnp.concatenate([out2d.reshape(-1), tail]).reshape(orig_shape)


def _reference(pre_v, real_v):
    m = 0.5 * (pre_v + real_v)
    return 0.5 * (real_v * jnp.log(real_v / m) + pre_v * jnp.log(pre_v / m))


if __name__ == "__main__":
    key = jax.random.PRNGKey(0)
    k1, k2, k3, k4, k5, k6 = jax.random.split(key, 6)

    # 1) Module-sized NCHW input, positive (probability-like) values.
    shape = (2, 4, 16, 16)
    pre_v = jax.nn.softmax(jax.random.normal(k1, shape, jnp.float32), axis=-1)
    real_v = jax.nn.softmax(jax.random.normal(k2, shape, jnp.float32), axis=-1)
    out = jax.block_until_ready(js_divergence(pre_v, real_v))
    assert out.shape == shape
    assert jnp.allclose(out, _reference(pre_v, real_v), atol=1e-6, rtol=1e-6)

    # 2) Lane-aligned but rows % 8 != 0 and not tile-divisible: exercises the
    #    cdiv grid + boundary-block (masked last tile) path with a tiny tile.
    shape2 = (30, 128)
    p2 = jax.nn.softmax(jax.random.normal(k3, shape2, jnp.float32), axis=-1)
    r2 = jax.nn.softmax(jax.random.normal(k4, shape2, jnp.float32), axis=-1)
    out2 = jax.block_until_ready(js_divergence(p2, r2, max_tile_rows=8))
    assert jnp.allclose(out2, _reference(p2, r2), atol=1e-6, rtol=1e-6)

    # 3) Ragged size (n % 128 != 0): aligned prefix in-kernel + jnp tail.
    shape3 = (7, 37)
    p3 = jax.nn.softmax(jax.random.normal(k5, shape3, jnp.float32), axis=-1)
    r3 = jax.nn.softmax(jax.random.normal(k6, shape3, jnp.float32), axis=-1)
    out3 = jax.block_until_ready(js_divergence(p3, r3))
    assert jnp.allclose(out3, _reference(p3, r3), atol=1e-6, rtol=1e-6)

    print("KERNEL_OK")
</pallas_src>

<mosaic_0001>
module attributes {stable_mosaic.version = 11 : i64} {
  func.func @_js_kernel(%arg0: i32, %arg1: memref<16x128xf32, #tpu.memory_space<vmem>>, %arg2: memref<16x128xf32, #tpu.memory_space<vmem>>, %arg3: memref<16x128xf32, #tpu.memory_space<vmem>>) attributes {dimension_semantics = [#tpu.dimension_semantics<parallel>], iteration_bounds = array<i64: 1>, scalar_prefetch = 0 : i64, scratch_operands = 0 : i64, tpu.core_type = #tpu.core_type<tc>, window_params = [{transform_indices = @transform_0, window_bounds = array<i64: 16, 128>}, {transform_indices = @transform_1, window_bounds = array<i64: 16, 128>}, {transform_indices = @transform_2, window_bounds = array<i64: 16, 128>}]} {
    %c0 = arith.constant 0 : index
    %c0_0 = arith.constant 0 : index
    %0 = vector.load %arg1[%c0, %c0_0] : memref<16x128xf32, #tpu.memory_space<vmem>>, vector<16x128xf32>
    %c0_1 = arith.constant 0 : index
    %c0_2 = arith.constant 0 : index
    %1 = vector.load %arg2[%c0_1, %c0_2] : memref<16x128xf32, #tpu.memory_space<vmem>>, vector<16x128xf32>
    %2 = arith.addf %0, %1 : vector<16x128xf32>
    %cst = arith.constant 5.000000e-01 : f32
    %3 = vector.broadcast %cst : f32 to vector<16x128xf32>
    %4 = arith.mulf %3, %2 : vector<16x128xf32>
    %cst_3 = arith.constant 1.000000e+00 : f32
    %5 = vector.broadcast %cst_3 : f32 to vector<16x128xf32>
    %6 = arith.divf %5, %4 : vector<16x128xf32>
    %7 = arith.mulf %1, %6 : vector<16x128xf32>
    %8 = math.log %7 : vector<16x128xf32>
    %9 = arith.mulf %1, %8 : vector<16x128xf32>
    %10 = arith.mulf %0, %6 : vector<16x128xf32>
    %11 = math.log %10 : vector<16x128xf32>
    %12 = arith.mulf %0, %11 : vector<16x128xf32>
    %13 = arith.addf %9, %12 : vector<16x128xf32>
    %cst_4 = arith.constant 5.000000e-01 : f32
    %14 = vector.broadcast %cst_4 : f32 to vector<16x128xf32>
    %15 = arith.mulf %14, %13 : vector<16x128xf32>
    %c0_5 = arith.constant 0 : index
    %c0_6 = arith.constant 0 : index
    %16 = vector.load %arg3[%c0_5, %c0_6] : memref<16x128xf32, #tpu.memory_space<vmem>>, vector<16x128xf32>
    tpu.vector_store %arg3[%c0_5, %c0_6], %15 {strides = array<i32>} : memref<16x128xf32, #tpu.memory_space<vmem>>, vector<16x128xf32>,
    return
  }
  func.func @transform_0(%arg0: i32) -> (i32, i32) {
    %c0_i32 = arith.constant 0 : i32
    %c0_i32_0 = arith.constant 0 : i32
    return %arg0, %c0_i32 : i32, i32
  }
  func.func @transform_1(%arg0: i32) -> (i32, i32) {
    %c0_i32 = arith.constant 0 : i32
    %c0_i32_0 = arith.constant 0 : i32
    return %arg0, %c0_i32 : i32, i32
  }
  func.func @transform_2(%arg0: i32) -> (i32, i32) {
    %c0_i32 = arith.constant 0 : i32
    %c0_i32_0 = arith.constant 0 : i32
    return %arg0, %c0_i32 : i32, i32
  }
}

</mosaic_0001>

<llo_original>
// kernel: tpu_custom_call.1
$region0: #{tpu_custom_call.1}
  #allocation0 [shape = 'u32[]', space=smem, size = 0x4, offset = 0x4, fixed_abs, tag = 'smem constant byte address 0x4 - core index']
  #allocation1 [shape = 'u32[144,128]{1,0:T(1,128)}', space=vmem, size = 0x12000, scoped, tag = 'internal scratch']
  %s0 = inlined_call_operand.hbm [shape: f32[16,128], index: 0, kind: input, shape index: {}]
  %s1 = inlined_call_operand.hbm [shape: f32[16,128], index: 1, kind: input, shape index: {}]
  %s2 = inlined_call_operand.hbm [shape: f32[16,128], index: 2, kind: output, shape index: {}]
  %s3 = sld [smem:[#allocation0]]
  $region26: #{tpu_custom_call.1} parent=0
    _
  %s5 = ssub.s32 1, %s3
  %s6 = scalar_select 0, %s5, %s3
  $region1: #{tpu_custom_call.1} parent=0
    #allocation2 [shape = 'u8[8192]{0}', space=vmem, size = 0x2000, scoped, tag = 'input window, operand 0, single buffered']
    #allocation3 [shape = 's32[1]{0}', space=sflag, size = 0x4, scoped, tag = 'scoped memory for tpu_custom_call.1']
    #allocation4 [shape = 's32[1]{0}', space=sflag, size = 0x4, scoped, tag = 'scoped memory for tpu_custom_call.1']
    #allocation5 [shape = 'u8[8192]{0}', space=vmem, size = 0x2000, scoped, tag = 'input window, operand 1, single buffered']
    #allocation6 [shape = 's32[1]{0}', space=sflag, size = 0x4, scoped, tag = 'scoped memory for tpu_custom_call.1']
    #allocation7 [shape = 'u8[8192]{0}', space=vmem, size = 0x2000, scoped, tag = 'output window, operand 0, single buffered']
    %7 = vsyncpa [#allocation3], 0
    %8 = vsyncpa [#allocation6], 0
    %9 = vsyncpa [#allocation4], 0
    // Predicated region
    $region2: #{tpu_custom_call.1} parent=1 // pred_check
      _
    $region3: #{tpu_custom_call.1} parent=1 // pred_check_branch
      %11 = sbr.rel (0) target = $region5
    $region4: #{tpu_custom_call.1} parent=1 // pred_region
      %s13 = ssub.s32 256, 256
      %14 = vsyncadd [#allocation3], %s13
      %s15 = sshll.u32 [#allocation2], 4
      %s16 = int_to_ptr.vmem [resolvable:$true] %s15
      %21 = dma.hbm_to_vmem [thread:$0]  %s0, 256, %s16, [#allocation3], 128, 128, 8
    $region5: #{tpu_custom_call.1} parent=1 // pred_fallthru
      _
    // Predicated region
    $region6: #{tpu_custom_call.1} parent=1 // pred_check
      _
    $region7: #{tpu_custom_call.1} parent=1 // pred_check_branch
      %23 = sbr.rel (0) target = $region9
    $region8: #{tpu_custom_call.1} parent=1 // pred_region
      %s25 = ssub.s32 256, 256
      %26 = vsyncadd [#allocation6], %s25
      %s27 = sshll.u32 [#allocation5], 4
      %s28 = int_to_ptr.vmem [resolvable:$true] %s27
      %33 = dma.hbm_to_vmem [thread:$0]  %s1, 256, %s28, [#allocation6], 128, 128, 8
    $region9: #{tpu_custom_call.1} parent=1 // pred_fallthru
      _
    // Predicated region
    $region10: #{tpu_custom_call.1} parent=1 // pred_check
      _
    $region11: #{tpu_custom_call.1} parent=1 // pred_check_branch
      %35 = sbr.rel (0) target = $region13
    $region12: #{tpu_custom_call.1} parent=1 // pred_region
      %36 = dma.done [#allocation3], 256
    $region13: #{tpu_custom_call.1} parent=1 // pred_fallthru
      _
    // Predicated region
    $region14: #{tpu_custom_call.1} parent=1 // pred_check
      _
    $region15: #{tpu_custom_call.1} parent=1 // pred_check_branch
      %38 = sbr.rel (0) target = $region17
    $region16: #{tpu_custom_call.1} parent=1 // pred_region
      %39 = dma.done [#allocation6], 256
    $region17: #{tpu_custom_call.1} parent=1 // pred_fallthru
      _
    %v40 = vld [vmem:[#allocation2] sm:$0xff]
    %v41 = vld [vmem:[#allocation2 + $0x8] sm:$0xff]
    %v42 = vld [vmem:[#allocation5] sm:$0xff]
    %v43 = vld [vmem:[#allocation5 + $0x8] sm:$0xff]
    %v44 = vadd.f32 %v40, %v42
    %v45 = vadd.f32 %v41, %v43
    %v46 = vmul.f32 %v44, 0.5
    %v47 = vmul.f32 %v45, 0.5
    %v48 = vrcp.pop %v46
    %v49 = vmul.f32 1.0, %v48
    %v50 = vrcp.pop %v47
    %v51 = vmul.f32 1.0, %v50
    %v52 = vmul.f32 %v42, %v49
    %v53 = vmul.f32 %v43, %v51
    %v54 = vlog2.pop %v52
    %v55 = vmul.f32 %v54, 0.6931472
    %v56 = vlog2.pop %v53
    %v57 = vmul.f32 %v56, 0.6931472
    %v58 = vmul.f32 %v42, %v55
    %v59 = vmul.f32 %v43, %v57
    %v60 = vmul.f32 %v40, %v49
    %v61 = vmul.f32 %v41, %v51
    %v62 = vlog2.pop %v60
    %v63 = vmul.f32 %v62, 0.6931472
    %v64 = vlog2.pop %v61
    %v65 = vmul.f32 %v64, 0.6931472
    %v66 = vmul.f32 %v40, %v63
    %v67 = vmul.f32 %v41, %v65
    %v68 = vadd.f32 %v58, %v66
    %v69 = vadd.f32 %v59, %v67
    %v70 = vmul.f32 %v68, 0.5
    %v71 = vmul.f32 %v69, 0.5
    %72 = vst [vmem:[#allocation7] sm:$0xff] %v70
    %73 = vst [vmem:[#allocation7 + $0x8] sm:$0xff] %v71
    // Predicated region
    $region18: #{tpu_custom_call.1} parent=1 // pred_check
      _
    $region19: #{tpu_custom_call.1} parent=1 // pred_check_branch
      %75 = sbr.rel (0) target = $region21
    $region20: #{tpu_custom_call.1} parent=1 // pred_region
      %s77 = ssub.s32 256, 256
      %78 = vsyncadd [#allocation4], %s77
      %s79 = sshll.u32 [#allocation7], 4
      %s80 = int_to_ptr.vmem [resolvable:$true] %s79
      %85 = dma.vmem_to_hbm [thread:$0]  %s80, 256, %s2, [#allocation4], 128, 128, 8
    $region21: #{tpu_custom_call.1} parent=1 // pred_fallthru
      _
    // Predicated region
    $region22: #{tpu_custom_call.1} parent=1 // pred_check
      _
    $region23: #{tpu_custom_call.1} parent=1 // pred_check_branch
      %87 = sbr.rel (0) target = $region25
    $region24: #{tpu_custom_call.1} parent=1 // pred_region
      %88 = dma.done [#allocation4], 256
    $region25: #{tpu_custom_call.1} parent=1 // pred_fallthru
      _
    %89 = vsyncpa [#allocation3], 1
    %90 = vsyncpa [#allocation6], 1
    %91 = vsyncpa [#allocation4], 1

</llo_original>
